<compile_context>
chip_gen: v5e
topology: v5e:2x2
jax: 0.10.0
libtpu: 0.0.40
codegen_flags: <defaults>
</compile_context>

<pallas_src>
import functools
import math

import jax
import jax.numpy as jnp
import numpy as np
from jax import lax
from jax.experimental import pallas as pl
from jax.experimental.pallas import tpu as pltpu


# ---------------------------------------------------------------------------
# Pallas kernel: CausalCrossConditionalSelfAttention (batch_block rows / step)
# ---------------------------------------------------------------------------
def _attn_kernel(x_ref, wqkv_ref, wp_ref, bqkv_ref, bp_ref, mask_ref, o_ref,
                 qkv_scratch, y_scratch, *, n_head, seq_len, batch_block):
    T = seq_len
    C = wp_ref.shape[0]
    D = C // n_head

    # Fused QKV projection over all batch_block*T rows: one tall MXU pass with
    # f32 accumulation, then a single bulk f32 -> bf16 cast.  1/sqrt(D) is
    # already folded into the Q columns of wqkv / Q slice of bqkv.
    qkv = jnp.dot(x_ref[...], wqkv_ref[...],
                  preferred_element_type=jnp.float32) + bqkv_ref[...]
    qkv_scratch[...] = qkv.reshape(batch_block, T, 3 * C).astype(jnp.bfloat16)

    mask = mask_ref[...].astype(jnp.float32)   # (T, T) additive: 0 / -1e9
    bp = bp_ref[...]                           # (1, C) f32

    # Batch elements iterate in an scf.for so per-element intermediates don't
    # all stay live simultaneously (bounded live ranges -> no vreg spills).
    @pl.loop(0, batch_block)
    def _(b):
        qkv_b = qkv_scratch[b]                 # (T, 3C) bf16; static slices below
        for h in range(n_head):                # n_head is small & static
            q = qkv_b[:, h * D:(h + 1) * D]
            k = qkv_b[:, C + h * D:C + (h + 1) * D]
            v = qkv_b[:, 2 * C + h * D:2 * C + (h + 1) * D]
            # q @ k^T: contract the feature axis of both (no explicit transpose)
            att = lax.dot_general(q, k, (((1,), (1,)), ((), ())),
                                  preferred_element_type=jnp.float32) + mask
            att = att - jnp.max(att, axis=-1, keepdims=True)
            e = jnp.exp(att)                   # masked entries underflow to 0
            denom = jnp.sum(e, axis=-1, keepdims=True)
            p = (e * pl.reciprocal(denom, approx=True)).astype(jnp.bfloat16)
            # Head output lands in its static column slice: no concat/relayout.
            y_scratch[:, h * D:(h + 1) * D] = jnp.dot(
                p, v, preferred_element_type=jnp.float32)
        # Single full-C-contraction output projection per batch element.
        out = jnp.dot(y_scratch[...].astype(jnp.bfloat16), wp_ref[...],
                      preferred_element_type=jnp.float32) + bp
        o_ref[pl.ds(pl.multiple_of(b * T, T), T), :] = out


def pack_attention_params(attn, n_head):
    """PyTorch-convention (out,in) weights -> fused, transposed, bf16 operands.

    Done ONCE, outside the jitted forward, so no transpose/concat/cast traffic
    sits in front of the kernel at run time.
    """
    C = attn["wq"].shape[0]
    D = C // n_head
    scale = 1.0 / math.sqrt(D)
    wqkv = jnp.concatenate(
        [attn["wq"].T * scale, attn["wk"].T, attn["wv"].T], axis=1,
    ).astype(jnp.bfloat16)                                            # (C, 3C)
    bqkv = jnp.concatenate(
        [attn["bq"] * scale, attn["bk"], attn["bv"]]
    ).reshape(1, 3 * C).astype(jnp.float32)
    wp = attn["wp"].T.astype(jnp.bfloat16)                            # (C, C)
    bp = attn["bp"].reshape(1, C).astype(jnp.float32)
    return {"wqkv": wqkv, "bqkv": bqkv, "wp": wp, "bp": bp}


def causal_cross_cond_self_attention(x, packed, n_head, *, batch_block=1):
    """x: (B, T, C) float32.  packed: output of pack_attention_params."""
    B, T, C = x.shape
    assert C % n_head == 0 and T % 2 == 0
    batch_block = min(batch_block, B)
    assert B % batch_block == 0
    t_half = T // 2

    wqkv, bqkv = packed["wqkv"], packed["bqkv"]
    wp, bp = packed["wp"], packed["bp"]

    # Grid-invariant cross-conditional causal mask (bf16), hoisted & constant
    # folded under jit: (i, j) allowed iff (j mod t) <= (i mod t), i.e.
    # tril(t, t) tiled 2x2.
    r = np.arange(T)
    allowed = (r[None, :] % t_half) <= (r[:, None] % t_half)
    mask = jnp.asarray(np.where(allowed, 0.0, -1e9), jnp.bfloat16)

    rows = batch_block * T
    x2 = x.reshape(B * T, C).astype(jnp.bfloat16)

    kernel = functools.partial(_attn_kernel, n_head=n_head, seq_len=T,
                               batch_block=batch_block)
    const = lambda shape: pl.BlockSpec(shape, lambda i: (0, 0))

    out = pl.pallas_call(
        kernel,
        out_shape=jax.ShapeDtypeStruct((B * T, C), jnp.float32),
        grid=(B // batch_block,),
        in_specs=[
            pl.BlockSpec((rows, C), lambda i: (i, 0)),   # batch_block rows of x
            const((C, 3 * C)),                           # fused Wqkv^T (bf16)
            const((C, C)),                               # Wp^T (bf16)
            const((1, 3 * C)),                           # fused qkv bias (f32)
            const((1, C)),                               # proj bias (f32)
            const((T, T)),                               # additive mask (bf16)
        ],
        out_specs=pl.BlockSpec((rows, C), lambda i: (i, 0)),
        scratch_shapes=[
            pltpu.VMEM((batch_block, T, 3 * C), jnp.bfloat16),  # qkv activations
            pltpu.VMEM((T, C), jnp.float32),                    # per-elem head outs
        ],
        compiler_params=pltpu.CompilerParams(
            dimension_semantics=("parallel",),           # megacore-shardable
            vmem_limit_bytes=64 * 1024 * 1024),
    )(x2, wqkv, wp, bqkv, bp, mask)
    return out.reshape(B, T, C)


# ---------------------------------------------------------------------------
# Pure-JAX reference attention (mirror of the PyTorch forward, f32, eval mode)
# ---------------------------------------------------------------------------
def _attention_reference(x, p, n_head):
    B, T, C = x.shape
    D = C // n_head
    t = T // 2

    def lin(inp, w, b):
        return inp @ w.T + b

    q = lin(x, p["wq"], p["bq"]).reshape(B, T, n_head, D).transpose(0, 2, 1, 3)
    k = lin(x, p["wk"], p["bk"]).reshape(B, T, n_head, D).transpose(0, 2, 1, 3)
    v = lin(x, p["wv"], p["bv"]).reshape(B, T, n_head, D).transpose(0, 2, 1, 3)
    att = (q @ jnp.swapaxes(k, -2, -1)) * (1.0 / math.sqrt(D))
    m = jnp.tile(jnp.tril(jnp.ones((t, t), jnp.float32)), (2, 2))
    att = jnp.where(m[None, None] == 0, -jnp.inf, att)
    att = jax.nn.softmax(att, axis=-1)
    y = (att @ v).transpose(0, 2, 1, 3).reshape(B, T, C)
    return lin(y, p["wp"], p["bp"])


# ---------------------------------------------------------------------------
# Model glue (embeddings, LayerNorm, MLP) -- plain JAX, shared by both paths
# ---------------------------------------------------------------------------
def _layer_norm(x, w, b, eps=1e-5):
    mu = jnp.mean(x, axis=-1, keepdims=True)
    var = jnp.mean(jnp.square(x - mu), axis=-1, keepdims=True)
    return (x - mu) * lax.rsqrt(var + eps) * w + b


def _block_forward(x, p, n_head, attn_fn):
    x = x + attn_fn(_layer_norm(x, p["ln1_w"], p["ln1_b"]), p["attn"], n_head)
    h = _layer_norm(x, p["ln2_w"], p["ln2_b"])
    h = jax.nn.gelu(h @ p["fc_w"].T + p["fc_b"], approximate=False)
    h = h @ p["proj_w"].T + p["proj_b"]
    return x + h          # MLP dropout = identity (eval mode)


def cross_cond_gpt_base_forward(params, index_up, index_down,
                                n_head, block_size, attn_fn):
    _, t_up = index_up.shape
    _, t_down = index_down.shape
    assert t_up == t_down and t_up <= block_size
    t = t_up
    tok_up = jnp.take(params["tok_emb_up"], index_up, axis=0)        # (B, t, C)
    tok_down = jnp.take(params["tok_emb_down"], index_down, axis=0)  # (B, t, C)
    tok = jnp.concatenate([tok_up, tok_down], axis=1)                # (B, 2t, C)
    pos = jnp.concatenate([params["pos_emb"][:, :t, :],
                           params["pos_emb"][:, block_size:block_size + t, :]],
                          axis=1)
    x = tok + pos            # embd dropout = identity (eval mode)
    for blk in params["blocks"]:
        x = _block_forward(x, blk, n_head, attn_fn)
    return x


def prepare_params_for_kernel(params, n_head):
    """Replace each block's raw attention params with packed bf16 operands."""
    prepared = dict(params)
    prepared["blocks"] = [
        dict(blk, attn=pack_attention_params(blk["attn"], n_head))
        for blk in params["blocks"]
    ]
    return prepared


def _init_params(key, cfg):
    C = cfg["n_embd"]
    keys = jax.random.split(key, 64)
    it = iter(range(64))

    def nrm(shape, std=0.02):
        return std * jax.random.normal(keys[next(it)], shape, jnp.float32)

    params = {
        "tok_emb_up": nrm((cfg["vocab_size_up"], C)),
        "tok_emb_down": nrm((cfg["vocab_size_down"], C)),
        "pos_emb": nrm((1, cfg["block_size"] * 2, C)),
        "blocks": [],
    }
    for _ in range(cfg["n_layer"]):
        params["blocks"].append({
            "ln1_w": 1.0 + nrm((C,)), "ln1_b": nrm((C,)),
            "ln2_w": 1.0 + nrm((C,)), "ln2_b": nrm((C,)),
            "attn": {
                "wq": nrm((C, C)), "bq": nrm((C,)),
                "wk": nrm((C, C)), "bk": nrm((C,)),
                "wv": nrm((C, C)), "bv": nrm((C,)),
                "wp": nrm((C, C)), "bp": nrm((C,)),
            },
            "fc_w": nrm((4 * C, C)), "fc_b": nrm((4 * C,)),
            "proj_w": nrm((C, 4 * C)), "proj_b": nrm((C,)),
        })
    return params


if __name__ == "__main__":
    cfg = dict(vocab_size_up=16, vocab_size_down=16, n_embd=32, n_head=4,
               block_size=8, n_layer=2)
    B, t = 4, 4          # sequence fed to the blocks is T = 2*t = 8

    key = jax.random.PRNGKey(0)
    kp, ku, kd = jax.random.split(key, 3)
    params = _init_params(kp, cfg)
    index_up = jax.random.randint(ku, (B, t), 0, cfg["vocab_size_up"], jnp.int32)
    index_down = jax.random.randint(kd, (B, t), 0, cfg["vocab_size_down"], jnp.int32)

    # Weight packing happens ONCE, outside the jitted forward.
    kernel_params = prepare_params_for_kernel(params, cfg["n_head"])

    # batch_block=2 -> grid of 2 parallel steps of (2*T, C) rows each;
    # raise on v5e/v6e (128 MiB VMEM), keep small on v7x (64 MiB).
    attn_fn = functools.partial(causal_cross_cond_self_attention, batch_block=2)

    fwd = jax.jit(functools.partial(
        cross_cond_gpt_base_forward, n_head=cfg["n_head"],
        block_size=cfg["block_size"], attn_fn=attn_fn))
    out = jax.block_until_ready(fwd(kernel_params, index_up, index_down))

    ref_fwd = jax.jit(functools.partial(
        cross_cond_gpt_base_forward, n_head=cfg["n_head"],
        block_size=cfg["block_size"], attn_fn=_attention_reference))
    ref = jax.block_until_ready(ref_fwd(params, index_up, index_down))

    # bf16 MXU operands + approx reciprocal => loosened tolerance vs f32 ref.
    np.testing.assert_allclose(np.asarray(out), np.asarray(ref),
                               rtol=2e-2, atol=5e-3)
    print("KERNEL_OK")
</pallas_src>

<mosaic_0001>
module attributes {stable_mosaic.version = 11 : i64} {
  func.func @_attn_kernel(%arg0: i32, %arg1: memref<16x32xbf16, #tpu.memory_space<vmem>>, %arg2: memref<32x96xbf16, #tpu.memory_space<vmem>>, %arg3: memref<32x32xbf16, #tpu.memory_space<vmem>>, %arg4: memref<1x96xf32, #tpu.memory_space<vmem>>, %arg5: memref<1x32xf32, #tpu.memory_space<vmem>>, %arg6: memref<8x8xbf16, #tpu.memory_space<vmem>>, %arg7: memref<16x32xf32, #tpu.memory_space<vmem>>, %arg8: memref<2x8x96xbf16, #tpu.memory_space<vmem>>, %arg9: memref<8x32xf32, #tpu.memory_space<vmem>>) attributes {dimension_semantics = [#tpu.dimension_semantics<parallel>], iteration_bounds = array<i64: 2>, scalar_prefetch = 0 : i64, scratch_operands = 2 : i64, tpu.core_type = #tpu.core_type<tc>, window_params = [{transform_indices = @transform_0, window_bounds = array<i64: 16, 32>}, {pipeline_mode = #tpu.pipeline_mode<synchronous>, transform_indices = @transform_1, window_bounds = array<i64: 32, 96>}, {pipeline_mode = #tpu.pipeline_mode<synchronous>, transform_indices = @transform_2, window_bounds = array<i64: 32, 32>}, {pipeline_mode = #tpu.pipeline_mode<synchronous>, transform_indices = @transform_3, window_bounds = array<i64: 1, 96>}, {pipeline_mode = #tpu.pipeline_mode<synchronous>, transform_indices = @transform_4, window_bounds = array<i64: 1, 32>}, {pipeline_mode = #tpu.pipeline_mode<synchronous>, transform_indices = @transform_5, window_bounds = array<i64: 8, 8>}, {transform_indices = @transform_6, window_bounds = array<i64: 16, 32>}]} {
    %c0 = arith.constant 0 : index
    %c0_0 = arith.constant 0 : index
    %0 = vector.load %arg1[%c0, %c0_0] : memref<16x32xbf16, #tpu.memory_space<vmem>>, vector<16x32xbf16>
    %c0_1 = arith.constant 0 : index
    %c0_2 = arith.constant 0 : index
    %1 = vector.load %arg2[%c0_1, %c0_2] : memref<32x96xbf16, #tpu.memory_space<vmem>>, vector<32x96xbf16>
    %cst = arith.constant dense<0.000000e+00> : vector<16x96xf32>
    %2 = tpu.matmul %0, %1, %cst {dimension_numbers = #tpu.dot_dimension_numbers<[1], [0], [0], [1], [0, 0, 1, 1], [], []>} : vector<16x32xbf16>, vector<32x96xbf16>, vector<16x96xf32> -> vector<16x96xf32>
    %c0_3 = arith.constant 0 : index
    %c0_4 = arith.constant 0 : index
    %3 = vector.load %arg4[%c0_3, %c0_4] : memref<1x96xf32, #tpu.memory_space<vmem>>, vector<1x96xf32>
    %4 = vector.broadcast %3 : vector<1x96xf32> to vector<16x96xf32>
    %5 = arith.addf %2, %4 : vector<16x96xf32>
    %6 = vector.shape_cast %5 : vector<16x96xf32> to vector<2x8x96xf32>
    %7 = arith.truncf %6 : vector<2x8x96xf32> to vector<2x8x96xbf16>
    %c0_5 = arith.constant 0 : index
    %c0_6 = arith.constant 0 : index
    %c0_7 = arith.constant 0 : index
    %8 = vector.load %arg8[%c0_5, %c0_6, %c0_7] : memref<2x8x96xbf16, #tpu.memory_space<vmem>>, vector<2x8x96xbf16>
    tpu.vector_store %arg8[%c0_5, %c0_6, %c0_7], %7 {strides = array<i32>} : memref<2x8x96xbf16, #tpu.memory_space<vmem>>, vector<2x8x96xbf16>,
    %c0_8 = arith.constant 0 : index
    %c0_9 = arith.constant 0 : index
    %9 = vector.load %arg6[%c0_8, %c0_9] : memref<8x8xbf16, #tpu.memory_space<vmem>>, vector<8x8xbf16>
    %10 = arith.extf %9 : vector<8x8xbf16> to vector<8x8xf32>
    %c0_10 = arith.constant 0 : index
    %c0_11 = arith.constant 0 : index
    %11 = vector.load %arg5[%c0_10, %c0_11] : memref<1x32xf32, #tpu.memory_space<vmem>>, vector<1x32xf32>
    %c0_i32 = arith.constant 0 : i32
    %c2_i32 = arith.constant 2 : i32
    %12 = arith.addi %c0_i32, %c2_i32 : i32
    %c1_i32 = arith.constant 1 : i32
    scf.for %arg10 = %c0_i32 to %12 step %c1_i32  : i32 {
      %c1_i32_13 = arith.constant 1 : i32
      %13 = arith.muli %arg10, %c1_i32_13 : i32
      %c0_i32_14 = arith.constant 0 : i32
      %14 = arith.addi %c0_i32_14, %13 : i32
      %15 = arith.index_cast %14 : i32 to index
      %c0_15 = arith.constant 0 : index
      %c0_16 = arith.constant 0 : index
      %16 = vector.load %arg8[%15, %c0_15, %c0_16] : memref<2x8x96xbf16, #tpu.memory_space<vmem>>, vector<1x8x96xbf16>
      %17 = vector.shape_cast %16 : vector<1x8x96xbf16> to vector<8x96xbf16>
      %18 = vector.extract_strided_slice %17 {offsets = [0, 0], sizes = [8, 8], strides = [1, 1]} : vector<8x96xbf16> to vector<8x8xbf16>
      %19 = vector.extract_strided_slice %17 {offsets = [0, 32], sizes = [8, 8], strides = [1, 1]} : vector<8x96xbf16> to vector<8x8xbf16>
      %20 = vector.extract_strided_slice %17 {offsets = [0, 64], sizes = [8, 8], strides = [1, 1]} : vector<8x96xbf16> to vector<8x8xbf16>
      %cst_17 = arith.constant dense<0.000000e+00> : vector<8x8xf32>
      %21 = tpu.matmul %18, %19, %cst_17 {dimension_numbers = #tpu.dot_dimension_numbers<[1], [1], [0], [0], [0, 0, 1, 0], [], []>} : vector<8x8xbf16>, vector<8x8xbf16>, vector<8x8xf32> -> vector<8x8xf32>
      %22 = arith.addf %21, %10 : vector<8x8xf32>
      %cst_18 = arith.constant dense<0xFF800000> : vector<8xf32>
      %23 = vector.multi_reduction <maximumf>, %22, %cst_18 [1] : vector<8x8xf32> to vector<8xf32>
      %24 = vector.shape_cast %23 : vector<8xf32> to vector<8x1xf32>
      %25 = vector.broadcast %24 : vector<8x1xf32> to vector<8x8xf32>
      %26 = arith.subf %22, %25 : vector<8x8xf32>
      %27 = math.exp %26 : vector<8x8xf32>
      %cst_19 = arith.constant dense<0.000000e+00> : vector<8xf32>
      %28 = vector.multi_reduction <add>, %27, %cst_19 [1] : vector<8x8xf32> to vector<8xf32>
      %29 = vector.shape_cast %28 : vector<8xf32> to vector<8x1xf32>
      %30 = tpu.reciprocal %29 {approx = true} : vector<8x1xf32> -> vector<8x1xf32>
      %31 = vector.broadcast %30 : vector<8x1xf32> to vector<8x8xf32>
      %32 = arith.mulf %27, %31 : vector<8x8xf32>
      %33 = arith.truncf %32 : vector<8x8xf32> to vector<8x8xbf16>
      %cst_20 = arith.constant dense<0.000000e+00> : vector<8x8xf32>
      %34 = tpu.matmul %33, %20, %cst_20 {dimension_numbers = #tpu.dot_dimension_numbers<[1], [0], [0], [1], [0, 0, 1, 1], [], []>} : vector<8x8xbf16>, vector<8x8xbf16>, vector<8x8xf32> -> vector<8x8xf32>
      %c0_21 = arith.constant 0 : index
      %c0_22 = arith.constant 0 : index
      %35 = vector.load %arg9[%c0_21, %c0_22] : memref<8x32xf32, #tpu.memory_space<vmem>>, vector<8x8xf32>
      tpu.vector_store %arg9[%c0_21, %c0_22], %34 {strides = array<i32>} : memref<8x32xf32, #tpu.memory_space<vmem>>, vector<8x8xf32>,
      %36 = vector.extract_strided_slice %17 {offsets = [0, 8], sizes = [8, 8], strides = [1, 1]} : vector<8x96xbf16> to vector<8x8xbf16>
      %37 = vector.extract_strided_slice %17 {offsets = [0, 40], sizes = [8, 8], strides = [1, 1]} : vector<8x96xbf16> to vector<8x8xbf16>
      %38 = vector.extract_strided_slice %17 {offsets = [0, 72], sizes = [8, 8], strides = [1, 1]} : vector<8x96xbf16> to vector<8x8xbf16>
      %cst_23 = arith.constant dense<0.000000e+00> : vector<8x8xf32>
      %39 = tpu.matmul %36, %37, %cst_23 {dimension_numbers = #tpu.dot_dimension_numbers<[1], [1], [0], [0], [0, 0, 1, 0], [], []>} : vector<8x8xbf16>, vector<8x8xbf16>, vector<8x8xf32> -> vector<8x8xf32>
      %40 = arith.addf %39, %10 : vector<8x8xf32>
      %cst_24 = arith.constant dense<0xFF800000> : vector<8xf32>
      %41 = vector.multi_reduction <maximumf>, %40, %cst_24 [1] : vector<8x8xf32> to vector<8xf32>
      %42 = vector.shape_cast %41 : vector<8xf32> to vector<8x1xf32>
      %43 = vector.broadcast %42 : vector<8x1xf32> to vector<8x8xf32>
      %44 = arith.subf %40, %43 : vector<8x8xf32>
      %45 = math.exp %44 : vector<8x8xf32>
      %cst_25 = arith.constant dense<0.000000e+00> : vector<8xf32>
      %46 = vector.multi_reduction <add>, %45, %cst_25 [1] : vector<8x8xf32> to vector<8xf32>
      %47 = vector.shape_cast %46 : vector<8xf32> to vector<8x1xf32>
      %48 = tpu.reciprocal %47 {approx = true} : vector<8x1xf32> -> vector<8x1xf32>
      %49 = vector.broadcast %48 : vector<8x1xf32> to vector<8x8xf32>
      %50 = arith.mulf %45, %49 : vector<8x8xf32>
      %51 = arith.truncf %50 : vector<8x8xf32> to vector<8x8xbf16>
      %cst_26 = arith.constant dense<0.000000e+00> : vector<8x8xf32>
      %52 = tpu.matmul %51, %38, %cst_26 {dimension_numbers = #tpu.dot_dimension_numbers<[1], [0], [0], [1], [0, 0, 1, 1], [], []>} : vector<8x8xbf16>, vector<8x8xbf16>, vector<8x8xf32> -> vector<8x8xf32>
      %c0_27 = arith.constant 0 : index
      %c8 = arith.constant 8 : index
      %53 = vector.load %arg9[%c0_27, %c8] : memref<8x32xf32, #tpu.memory_space<vmem>>, vector<8x8xf32>
      tpu.vector_store %arg9[%c0_27, %c8], %52 {strides = array<i32>} : memref<8x32xf32, #tpu.memory_space<vmem>>, vector<8x8xf32>,
      %54 = vector.extract_strided_slice %17 {offsets = [0, 16], sizes = [8, 8], strides = [1, 1]} : vector<8x96xbf16> to vector<8x8xbf16>
      %55 = vector.extract_strided_slice %17 {offsets = [0, 48], sizes = [8, 8], strides = [1, 1]} : vector<8x96xbf16> to vector<8x8xbf16>
      %56 = vector.extract_strided_slice %17 {offsets = [0, 80], sizes = [8, 8], strides = [1, 1]} : vector<8x96xbf16> to vector<8x8xbf16>
      %cst_28 = arith.constant dense<0.000000e+00> : vector<8x8xf32>
      %57 = tpu.matmul %54, %55, %cst_28 {dimension_numbers = #tpu.dot_dimension_numbers<[1], [1], [0], [0], [0, 0, 1, 0], [], []>} : vector<8x8xbf16>, vector<8x8xbf16>, vector<8x8xf32> -> vector<8x8xf32>
      %58 = arith.addf %57, %10 : vector<8x8xf32>
      %cst_29 = arith.constant dense<0xFF800000> : vector<8xf32>
      %59 = vector.multi_reduction <maximumf>, %58, %cst_29 [1] : vector<8x8xf32> to vector<8xf32>
      %60 = vector.shape_cast %59 : vector<8xf32> to vector<8x1xf32>
      %61 = vector.broadcast %60 : vector<8x1xf32> to vector<8x8xf32>
      %62 = arith.subf %58, %61 : vector<8x8xf32>
      %63 = math.exp %62 : vector<8x8xf32>
      %cst_30 = arith.constant dense<0.000000e+00> : vector<8xf32>
      %64 = vector.multi_reduction <add>, %63, %cst_30 [1] : vector<8x8xf32> to vector<8xf32>
      %65 = vector.shape_cast %64 : vector<8xf32> to vector<8x1xf32>
      %66 = tpu.reciprocal %65 {approx = true} : vector<8x1xf32> -> vector<8x1xf32>
      %67 = vector.broadcast %66 : vector<8x1xf32> to vector<8x8xf32>
      %68 = arith.mulf %63, %67 : vector<8x8xf32>
      %69 = arith.truncf %68 : vector<8x8xf32> to vector<8x8xbf16>
      %cst_31 = arith.constant dense<0.000000e+00> : vector<8x8xf32>
      %70 = tpu.matmul %69, %56, %cst_31 {dimension_numbers = #tpu.dot_dimension_numbers<[1], [0], [0], [1], [0, 0, 1, 1], [], []>} : vector<8x8xbf16>, vector<8x8xbf16>, vector<8x8xf32> -> vector<8x8xf32>
      %c0_32 = arith.constant 0 : index
      %c16 = arith.constant 16 : index
      %71 = vector.load %arg9[%c0_32, %c16] : memref<8x32xf32, #tpu.memory_space<vmem>>, vector<8x8xf32>
      tpu.vector_store %arg9[%c0_32, %c16], %70 {strides = array<i32>} : memref<8x32xf32, #tpu.memory_space<vmem>>, vector<8x8xf32>,
      %72 = vector.extract_strided_slice %17 {offsets = [0, 24], sizes = [8, 8], strides = [1, 1]} : vector<8x96xbf16> to vector<8x8xbf16>
      %73 = vector.extract_strided_slice %17 {offsets = [0, 56], sizes = [8, 8], strides = [1, 1]} : vector<8x96xbf16> to vector<8x8xbf16>
      %74 = vector.extract_strided_slice %17 {offsets = [0, 88], sizes = [8, 8], strides = [1, 1]} : vector<8x96xbf16> to vector<8x8xbf16>
      %cst_33 = arith.constant dense<0.000000e+00> : vector<8x8xf32>
      %75 = tpu.matmul %72, %73, %cst_33 {dimension_numbers = #tpu.dot_dimension_numbers<[1], [1], [0], [0], [0, 0, 1, 0], [], []>} : vector<8x8xbf16>, vector<8x8xbf16>, vector<8x8xf32> -> vector<8x8xf32>
      %76 = arith.addf %75, %10 : vector<8x8xf32>
      %cst_34 = arith.constant dense<0xFF800000> : vector<8xf32>
      %77 = vector.multi_reduction <maximumf>, %76, %cst_34 [1] : vector<8x8xf32> to vector<8xf32>
      %78 = vector.shape_cast %77 : vector<8xf32> to vector<8x1xf32>
      %79 = vector.broadcast %78 : vector<8x1xf32> to vector<8x8xf32>
      %80 = arith.subf %76, %79 : vector<8x8xf32>
      %81 = math.exp %80 : vector<8x8xf32>
      %cst_35 = arith.constant dense<0.000000e+00> : vector<8xf32>
      %82 = vector.multi_reduction <add>, %81, %cst_35 [1] : vector<8x8xf32> to vector<8xf32>
      %83 = vector.shape_cast %82 : vector<8xf32> to vector<8x1xf32>
      %84 = tpu.reciprocal %83 {approx = true} : vector<8x1xf32> -> vector<8x1xf32>
      %85 = vector.broadcast %84 : vector<8x1xf32> to vector<8x8xf32>
      %86 = arith.mulf %81, %85 : vector<8x8xf32>
      %87 = arith.truncf %86 : vector<8x8xf32> to vector<8x8xbf16>
      %cst_36 = arith.constant dense<0.000000e+00> : vector<8x8xf32>
      %88 = tpu.matmul %87, %74, %cst_36 {dimension_numbers = #tpu.dot_dimension_numbers<[1], [0], [0], [1], [0, 0, 1, 1], [], []>} : vector<8x8xbf16>, vector<8x8xbf16>, vector<8x8xf32> -> vector<8x8xf32>
      %c0_37 = arith.constant 0 : index
      %c24 = arith.constant 24 : index
      %89 = vector.load %arg9[%c0_37, %c24] : memref<8x32xf32, #tpu.memory_space<vmem>>, vector<8x8xf32>
      tpu.vector_store %arg9[%c0_37, %c24], %88 {strides = array<i32>} : memref<8x32xf32, #tpu.memory_space<vmem>>, vector<8x8xf32>,
      %c0_38 = arith.constant 0 : index
      %c0_39 = arith.constant 0 : index
      %90 = vector.load %arg9[%c0_38, %c0_39] : memref<8x32xf32, #tpu.memory_space<vmem>>, vector<8x32xf32>
      %91 = arith.truncf %90 : vector<8x32xf32> to vector<8x32xbf16>
      %c0_40 = arith.constant 0 : index
      %c0_41 = arith.constant 0 : index
      %92 = vector.load %arg3[%c0_40, %c0_41] : memref<32x32xbf16, #tpu.memory_space<vmem>>, vector<32x32xbf16>
      %cst_42 = arith.constant dense<0.000000e+00> : vector<8x32xf32>
      %93 = tpu.matmul %91, %92, %cst_42 {dimension_numbers = #tpu.dot_dimension_numbers<[1], [0], [0], [1], [0, 0, 1, 1], [], []>} : vector<8x32xbf16>, vector<32x32xbf16>, vector<8x32xf32> -> vector<8x32xf32>
      %94 = vector.broadcast %11 : vector<1x32xf32> to vector<8x32xf32>
      %95 = arith.addf %93, %94 : vector<8x32xf32>
      %c8_i32 = arith.constant 8 : i32
      %96 = arith.muli %14, %c8_i32 : i32
      %97 = tpu.assume_multiple %96, 8 : i32
      %98 = arith.index_cast %97 : i32 to index
      %c0_43 = arith.constant 0 : index
      %99 = vector.load %arg7[%98, %c0_43] : memref<16x32xf32, #tpu.memory_space<vmem>>, vector<8x32xf32>
      tpu.vector_store %arg7[%98, %c0_43], %95 {strides = array<i32>} : memref<16x32xf32, #tpu.memory_space<vmem>>, vector<8x32xf32>,
    }
    %c2_i32_12 = arith.constant 2 : i32
    return
  }
  func.func @transform_0(%arg0: i32) -> (i32, i32) {
    %c0_i32 = arith.constant 0 : i32
    %c0_i32_0 = arith.constant 0 : i32
    return %arg0, %c0_i32 : i32, i32
  }
  func.func @transform_1(%arg0: i32) -> (i32, i32) {
    %c0_i32 = arith.constant 0 : i32
    %c0_i32_0 = arith.constant 0 : i32
    %c0_i32_1 = arith.constant 0 : i32
    return %c0_i32, %c0_i32_0 : i32, i32
  }
  func.func @transform_2(%arg0: i32) -> (i32, i32) {
    %c0_i32 = arith.constant 0 : i32
    %c0_i32_0 = arith.constant 0 : i32
    %c0_i32_1 = arith.constant 0 : i32
    return %c0_i32, %c0_i32_0 : i32, i32
  }
  func.func @transform_3(%arg0: i32) -> (i32, i32) {
    %c0_i32 = arith.constant 0 : i32
    %c0_i32_0 = arith.constant 0 : i32
    %c0_i32_1 = arith.constant 0 : i32
    return %c0_i32, %c0_i32_0 : i32, i32
  }
  func.func @transform_4(%arg0: i32) -> (i32, i32) {
    %c0_i32 = arith.constant 0 : i32
    %c0_i32_0 = arith.constant 0 : i32
    %c0_i32_1 = arith.constant 0 : i32
    return %c0_i32, %c0_i32_0 : i32, i32
  }
  func.func @transform_5(%arg0: i32) -> (i32, i32) {
    %c0_i32 = arith.constant 0 : i32
    %c0_i32_0 = arith.constant 0 : i32
    %c0_i32_1 = arith.constant 0 : i32
    return %c0_i32, %c0_i32_0 : i32, i32
  }
  func.func @transform_6(%arg0: i32) -> (i32, i32) {
    %c0_i32 = arith.constant 0 : i32
    %c0_i32_0 = arith.constant 0 : i32
    return %arg0, %c0_i32 : i32, i32
  }
}

</mosaic_0001>

<llo_original>
// kernel: cross_cond_gpt_base_forward.2
$region0: #{cross_cond_gpt_base_forward.2}
  #allocation0 [shape = 'u32[]', space=smem, size = 0x4, offset = 0x4, fixed_abs, tag = 'smem constant byte address 0x4 - core index']
  #allocation1 [shape = 'u32[72,128]{1,0:T(1,128)}', space=vmem, size = 0x9000, scoped, tag = 'internal scratch']
  #allocation2 [shape = 'bf16[2,8,96]{2,1,0:T(8,128)(2,1)}', space=vmem, size = 0x1000, scoped, tag = 'scratch operand']
  #allocation3 [shape = 'f32[8,32]{1,0:T(8,128)}', space=vmem, size = 0x1000, scoped, tag = 'scratch operand']
  %s0 = inlined_call_operand.vmem [shape: bf16[32,32], index: 0, kind: input, shape index: {}]
  %s1 = inlined_call_operand.vmem [shape: bf16[32,96], index: 1, kind: input, shape index: {}]
  %s2 = inlined_call_operand.vmem [shape: bf16[32,32], index: 2, kind: input, shape index: {}]
  %s3 = inlined_call_operand.vmem [shape: f32[1,96], index: 3, kind: input, shape index: {}]
  %s4 = inlined_call_operand.vmem [shape: f32[1,32], index: 4, kind: input, shape index: {}]
  %s5 = inlined_call_operand.vmem [shape: bf16[8,8], index: 5, kind: input, shape index: {}]
  %s6 = inlined_call_operand.vmem [shape: f32[32,32], index: 6, kind: output, shape index: {}]
  %s7 = sld [smem:[#allocation0]]
  $region64: #{cross_cond_gpt_base_forward.2} parent=0
    _
  %s9 = ssub.s32 1, %s7
  %s10 = scalar_select 0, %s9, %s7
  loop: start=0, step=1, limit=4
  $region2: #{cross_cond_gpt_base_forward.2} parent=0 // loop_pre_header
    _
  $region3: #{cross_cond_gpt_base_forward.2} parent=0 // loop_header
    %s12 = sphi 0, %s16
    %p13 = scmp.ge.s32.totalorder %s12, 4
    %s22 = sphi 0, %s24
    %s25 = sphi 0, %s22
    %s26 = sphi 0, %s25
    %s42 = sphi 0, %s26
    %s46 = sphi 0, %s46
    %s48 = sphi 0, %s46
    %s49 = sphi 0, %s48
    %s63 = sphi 0, %s49
    %s67 = sphi 0, %s67
    %s69 = sphi 0, %s67
    %s70 = sphi 0, %s69
    %s84 = sphi 0, %s70
    %s88 = sphi 0, %s88
    %s90 = sphi 0, %s88
    %s91 = sphi 0, %s90
    %s105 = sphi 0, %s91
    %s109 = sphi 0, %s109
    %s111 = sphi 0, %s109
    %s112 = sphi 0, %s111
    %s126 = sphi 0, %s112
    %s130 = sphi 0, %s130
    %s132 = sphi 0, %s130
    %s133 = sphi 0, %s132
    %s147 = sphi 0, %s133
    %s153 = sphi 0, %s155
    %s156 = sphi 0, %s153
    %s157 = sphi 0, %s156
    %s173 = sphi 0, %s157
  $region4: #{cross_cond_gpt_base_forward.2} parent=0 // loop_header_branch
    %15 = sbr.rel (%p13) target = $region8
  $region5: #{cross_cond_gpt_base_forward.2} parent=0 // loop_body
    %s17 = ssub.s32 %s12, 1
    %s18 = ssub.s32 %s12, 2
    %s19 = sadd.s32 %s12, 1
    %s20 = ssub.s32 %s12, %s19
    %p21 = scmp.eq.s32.totalorder %s20, 0
    %s23 = sadd.s32 %s22, 1
    %s24 = scalar_select %p21, %s22, %s23
    %p27 = pneg %p21
    %p28 = scmp.eq.s32.totalorder %s12, 1
    %p29 = por %p27, %p28
    %p30 = scmp.ne.s32.totalorder %s22, %s25
    %p31 = scmp.eq.s32.totalorder %s12, 0
    %p32 = por %p30, %p31
    %p33 = scmp.ne.s32.totalorder %s22, %s25
    %p34 = scmp.eq.s32.totalorder %s17, 1
    %p35 = por %p33, %p34
    %p36 = scmp.ne.s32.totalorder %s25, %s26
    %p37 = scmp.eq.s32.totalorder %s17, 0
    %p38 = por %p36, %p37
    %p39 = scmp.ne.s32.totalorder %s25, %s26
    %p40 = scmp.eq.s32.totalorder %s18, 1
    %p41 = por %p39, %p40
    %p43 = scmp.ne.s32.totalorder %s26, %s42
    %p44 = scmp.eq.s32.totalorder %s18, 0
    %p45 = por %p43, %p44
    %s47 = sadd.s32 %s46, 1
    %p50 = scmp.eq.s32.totalorder %s12, 1
    %p51 = scmp.ne.s32.totalorder %s46, %s48
    %p52 = scmp.eq.s32.totalorder %s12, 0
    %p53 = por %p51, %p52
    %p54 = scmp.ne.s32.totalorder %s46, %s48
    %p55 = scmp.eq.s32.totalorder %s17, 1
    %p56 = por %p54, %p55
    %p57 = scmp.ne.s32.totalorder %s48, %s49
    %p58 = scmp.eq.s32.totalorder %s17, 0
    %p59 = por %p57, %p58
    %p60 = scmp.ne.s32.totalorder %s48, %s49
    %p61 = scmp.eq.s32.totalorder %s18, 1
    %p62 = por %p60, %p61
    %p64 = scmp.ne.s32.totalorder %s49, %s63
    %p65 = scmp.eq.s32.totalorder %s18, 0
    %p66 = por %p64, %p65
    %s68 = sadd.s32 %s67, 1
    %p71 = scmp.eq.s32.totalorder %s12, 1
    %p72 = scmp.ne.s32.totalorder %s67, %s69
    %p73 = scmp.eq.s32.totalorder %s12, 0
    %p74 = por %p72, %p73
    %p75 = scmp.ne.s32.totalorder %s67, %s69
    %p76 = scmp.eq.s32.totalorder %s17, 1
    %p77 = por %p75, %p76
    %p78 = scmp.ne.s32.totalorder %s69, %s70
    %p79 = scmp.eq.s32.totalorder %s17, 0
    %p80 = por %p78, %p79
    %p81 = scmp.ne.s32.totalorder %s69, %s70
    %p82 = scmp.eq.s32.totalorder %s18, 1
    %p83 = por %p81, %p82
    %p85 = scmp.ne.s32.totalorder %s70, %s84
    %p86 = scmp.eq.s32.totalorder %s18, 0
    %p87 = por %p85, %p86
    %s89 = sadd.s32 %s88, 1
    %p92 = scmp.eq.s32.totalorder %s12, 1
    %p93 = scmp.ne.s32.totalorder %s88, %s90
    %p94 = scmp.eq.s32.totalorder %s12, 0
    %p95 = por %p93, %p94
    %p96 = scmp.ne.s32.totalorder %s88, %s90
    %p97 = scmp.eq.s32.totalorder %s17, 1
    %p98 = por %p96, %p97
    %p99 = scmp.ne.s32.totalorder %s90, %s91
    %p100 = scmp.eq.s32.totalorder %s17, 0
    %p101 = por %p99, %p100
    %p102 = scmp.ne.s32.totalorder %s90, %s91
    %p103 = scmp.eq.s32.totalorder %s18, 1
    %p104 = por %p102, %p103
    %p106 = scmp.ne.s32.totalorder %s91, %s105
    %p107 = scmp.eq.s32.totalorder %s18, 0
    %p108 = por %p106, %p107
    %s110 = sadd.s32 %s109, 1
    %p113 = scmp.eq.s32.totalorder %s12, 1
    %p114 = scmp.ne.s32.totalorder %s109, %s111
    %p115 = scmp.eq.s32.totalorder %s12, 0
    %p116 = por %p114, %p115
    %p117 = scmp.ne.s32.totalorder %s109, %s111
    %p118 = scmp.eq.s32.totalorder %s17, 1
    %p119 = por %p117, %p118
    %p120 = scmp.ne.s32.totalorder %s111, %s112
    %p121 = scmp.eq.s32.totalorder %s17, 0
    %p122 = por %p120, %p121
    %p123 = scmp.ne.s32.totalorder %s111, %s112
    %p124 = scmp.eq.s32.totalorder %s18, 1
    %p125 = por %p123, %p124
    %p127 = scmp.ne.s32.totalorder %s112, %s126
    %p128 = scmp.eq.s32.totalorder %s18, 0
    %p129 = por %p127, %p128
    %s131 = sadd.s32 %s130, 1
    %p134 = scmp.eq.s32.totalorder %s12, 1
    %p135 = scmp.ne.s32.totalorder %s130, %s132
    %p136 = scmp.eq.s32.totalorder %s12, 0
    %p137 = por %p135, %p136
    %p138 = scmp.ne.s32.totalorder %s130, %s132
    %p139 = scmp.eq.s32.totalorder %s17, 1
    %p140 = por %p138, %p139
    %p141 = scmp.ne.s32.totalorder %s132, %s133
    %p142 = scmp.eq.s32.totalorder %s17, 0
    %p143 = por %p141, %p142
    %p144 = scmp.ne.s32.totalorder %s132, %s133
    %p145 = scmp.eq.s32.totalorder %s18, 1
    %p146 = por %p144, %p145
    %p148 = scmp.ne.s32.totalorder %s133, %s147
    %p149 = scmp.eq.s32.totalorder %s18, 0
    %p150 = por %p148, %p149
    %s151 = ssub.s32 %s12, %s19
    %p152 = scmp.eq.s32.totalorder %s151, 0
    %s154 = sadd.s32 %s153, 1
    %s155 = scalar_select %p152, %s153, %s154
    %p158 = pneg %p152
    %p159 = scmp.eq.s32.totalorder %s12, 1
    %p160 = por %p158, %p159
    %p161 = scmp.ne.s32.totalorder %s153, %s156
    %p162 = scmp.eq.s32.totalorder %s12, 0
    %p163 = por %p161, %p162
    %p164 = scmp.ne.s32.totalorder %s153, %s156
    %p165 = scmp.eq.s32.totalorder %s17, 1
    %p166 = por %p164, %p165
    %p167 = scmp.ne.s32.totalorder %s156, %s157
    %p168 = scmp.eq.s32.totalorder %s17, 0
    %p169 = por %p167, %p168
    %p170 = scmp.ne.s32.totalorder %s156, %s157
    %p171 = scmp.eq.s32.totalorder %s18, 1
    %p172 = por %p170, %p171
    %p174 = scmp.ne.s32.totalorder %s157, %s173
    %p175 = scmp.eq.s32.totalorder %s18, 0
    %p176 = por %p174, %p175
    %p177 = scmp.le.s32.totalorder 1, %s12
    %p178 = scmp.lt.s32.totalorder %s12, 3
    %p179 = pnand %p177, %p178
    %p180 = pneg %p179
    // Predicated region
    $region9: #{cross_cond_gpt_base_forward.2} parent=5 // pred_check
      _
    $region10: #{cross_cond_gpt_base_forward.2} parent=5 // pred_check_branch
      %182 = sbr.rel (%p179) target = $region12
    $region11: #{cross_cond_gpt_base_forward.2} parent=5 // pred_region
      %s183 = ssub.s32 %s12, 1
      // Predicated region
      $region13: #{cross_cond_gpt_base_forward.2} parent=11 // pred_check
        %p184 = pneg %p59
      $region14: #{cross_cond_gpt_base_forward.2} parent=11 // pred_check_branch
        %186 = sbr.rel (%p184) target = $region16
      $region15: #{cross_cond_gpt_base_forward.2} parent=11 // pred_region
        _
      $region16: #{cross_cond_gpt_base_forward.2} parent=11 // pred_fallthru
        _
      // Predicated region
      $region17: #{cross_cond_gpt_base_forward.2} parent=11 // pred_check
        %p187 = pneg %p80
      $region18: #{cross_cond_gpt_base_forward.2} parent=11 // pred_check_branch
        %189 = sbr.rel (%p187) target = $region20
      $region19: #{cross_cond_gpt_base_forward.2} parent=11 // pred_region
        _
      $region20: #{cross_cond_gpt_base_forward.2} parent=11 // pred_fallthru
        _
      // Predicated region
      $region21: #{cross_cond_gpt_base_forward.2} parent=11 // pred_check
        %p190 = pneg %p101
      $region22: #{cross_cond_gpt_base_forward.2} parent=11 // pred_check_branch
        %192 = sbr.rel (%p190) target = $region24
      $region23: #{cross_cond_gpt_base_forward.2} parent=11 // pred_region
        _
      $region24: #{cross_cond_gpt_base_forward.2} parent=11 // pred_fallthru
        _
      // Predicated region
      $region25: #{cross_cond_gpt_base_forward.2} parent=11 // pred_check
        %p193 = pneg %p122
      $region26: #{cross_cond_gpt_base_forward.2} parent=11 // pred_check_branch
        %195 = sbr.rel (%p193) target = $region28
      $region27: #{cross_cond_gpt_base_forward.2} parent=11 // pred_region
        _
      $region28: #{cross_cond_gpt_base_forward.2} parent=11 // pred_fallthru
        _
      // Predicated region
      $region29: #{cross_cond_gpt_base_forward.2} parent=11 // pred_check
        %p196 = pneg %p143
      $region30: #{cross_cond_gpt_base_forward.2} parent=11 // pred_check_branch
        %198 = sbr.rel (%p196) target = $region32
      $region31: #{cross_cond_gpt_base_forward.2} parent=11 // pred_region
        _
      $region32: #{cross_cond_gpt_base_forward.2} parent=11 // pred_fallthru
        _
    $region12: #{cross_cond_gpt_base_forward.2} parent=5 // pred_fallthru
      _
    %p199 = scmp.lt.s32.totalorder %s12, 2
    // Predicated region
    $region33: #{cross_cond_gpt_base_forward.2} parent=5 // pred_check
      %p200 = pneg %p199
    $region34: #{cross_cond_gpt_base_forward.2} parent=5 // pred_check_branch
      %202 = sbr.rel (%p200) target = $region36
    $region35: #{cross_cond_gpt_base_forward.2} parent=5 // pred_region
      // Predicated region
      $region37: #{cross_cond_gpt_base_forward.2} parent=35 // pred_check
        %p203 = pneg %p32
      $region38: #{cross_cond_gpt_base_forward.2} parent=35 // pred_check_branch
        %205 = sbr.rel (%p203) target = $region40
      $region39: #{cross_cond_gpt_base_forward.2} parent=35 // pred_region
        %s206 = smul.u32 2, %s12
        %p207 = scmp.lt.s32.totalorder %s206, 3
        %s208 = scalar_select %p207, %s206, 3
        %s209 = smul.addr %s208, 4
        %s210 = scalar_lea.vmem %s0, %s209
        %s211 = smul.u32 2, %s12
      $region40: #{cross_cond_gpt_base_forward.2} parent=35 // pred_fallthru
        _
    $region36: #{cross_cond_gpt_base_forward.2} parent=5 // pred_fallthru
      _
    %p212 = scmp.le.s32.totalorder 1, %s12
    %p213 = scmp.lt.s32.totalorder %s12, 3
    %p214 = pnand %p212, %p213
    %p215 = pneg %p214
    // Predicated region
    $region41: #{cross_cond_gpt_base_forward.2} parent=5 // pred_check
      _
    $region42: #{cross_cond_gpt_base_forward.2} parent=5 // pred_check_branch
      %217 = sbr.rel (%p214) target = $region44
    $region43: #{cross_cond_gpt_base_forward.2} parent=5 // pred_region
      %s218 = ssub.s32 %s12, 1
      %s219 = smul.u32 2, %s17
      %p220 = scmp.lt.s32.totalorder %s219, 3
      %s221 = scalar_select %p220, %s219, 3
      %s222 = smul.addr %s221, 4
      %s223 = scalar_lea.vmem %s0, %s222
      %p224 = pneg %p38
      %p225 = pneg %p35
      %p226 = pneg %p59
      %p227 = pneg %p56
      %p228 = pneg %p80
      %p229 = pneg %p77
      %p230 = pneg %p101
      %p231 = pneg %p98
      %p232 = pneg %p122
      %p233 = pneg %p119
      %p234 = pneg %p143
      %p235 = pneg %p140
      %p236 = pneg %p169
      %p237 = pneg %p166
      %s238 = smul.u32 2, %s17
      %p239 = scmp.lt.s32.totalorder %s238, 3
      %s240 = scalar_select %p239, %s238, 3
      %s241 = smul.addr %s240, 8
      %s242 = scalar_lea.vmem %s6, %s241
      %s243 = smul.u32 2, %s17
      %p244 = scmp.lt.s32.totalorder %s243, 3
      %s245 = scalar_select %p244, %s243, 3
      %s246 = smul.addr %s245, 4
      %s247 = scalar_lea.vmem %s0, %s246
      %s248 = smul.u32 2, %s17
      %s249 = smul.u32 2, %s17
      %p250 = scmp.lt.s32.totalorder %s249, 3
      %s251 = scalar_select %p250, %s249, 3
      %s252 = smul.addr %s251, 8
      %s253 = scalar_lea.vmem %s6, %s252
      %s254 = smul.u32 2, %s17
      %v256 = vld [vmem:[%s247] sm:$0xf]
      %v257 = vld [vmem:[%s247 + $0x4] sm:$0xf]
      %v258 = vld [vmem:[%s1] sm:$0xf]
      %v259 = vld [vmem:[%s1 + $0x4] sm:$0xf]
      %v260 = vld [vmem:[%s1 + $0x8] sm:$0xf]
      %v261 = vld [vmem:[%s1 + $0xc] sm:$0xf]
      %v262 = vld [vmem:[%s3] sm:$0x1]
      %v264 = vperm.slane %v262, 0
      %v268 = vunpack.c.l.b16 %v256
      %v269 = vunpack.c.l.b16 %v257
      %v270 = vpack.c.b16 %v269, %v268
      %v275 = vunpack.c.l.b16 %v258
      %v276 = vunpack.c.l.b16 %v259
      %v277 = vunpack.c.l.b16 %v260
      %v278 = vunpack.c.l.b16 %v261
      %v279 = vpack.c.b16 %v276, %v275
      %v280 = vpack.c.b16 %v278, %v277
      %vm283 = vcmask 261120
      %v285 = vsel %vm283, %v270, 0
      %287 = vmatpush.bf16.msra.mxu0 0
      %288 = vmatpush.bf16.msra.mxu0 0
      %289 = vmatpush.bf16.msra.mxu0 0
      %290 = vmatpush.bf16.msra.mxu0 0
      %291 = vmatpush.bf16.msra.mxu0 0
      %292 = vmatpush.bf16.msra.mxu0 0
      %293 = vmatpush.bf16.msra.mxu0 %v280
      %294 = vmatpush.bf16.msra.mxu0 %v279
      %295 = vmatmul.bf16.gmra.mxu0 %v285
      %v296 = vpop.f32.mrf.mxu0
      %v297 = vadd.f32 %v264, %v296
      %v298 = vpop.f32.mrf.mxu0
      %v299 = vadd.f32 %v264, %v298
      %300 = vdwg.mxu0
      %v301 = vpack.c.bf16 %v297, %v297
      %v302 = vpack.c.bf16 %v299, %v299
      %vm303 = vcmask 781312
      %304 = vst.msk [vmem:[#allocation2] sm:$0xf] %vm303, %v301
      %305 = vst.msk [vmem:[#allocation2 + $0x4] sm:$0xf] %vm303, %v302
      %v306 = vld [vmem:[%s5] sm:$0xf]
      %v307 = vunpack.c.l.bf16 %v306
      %v308 = vld [vmem:[%s4] sm:$0x1]
      loop: start=0, step=1, limit=2
      $region45: #{cross_cond_gpt_base_forward.2} parent=43 // loop_pre_header
        _
      $region46: #{cross_cond_gpt_base_forward.2} parent=43 // loop_header
        %s310 = sphi 0, %s314
        %p311 = scmp.ge.s32.totalorder %s310, 2
      $region47: #{cross_cond_gpt_base_forward.2} parent=43 // loop_header_branch
        %313 = sbr.rel (%p311) target = $region51
      $region48: #{cross_cond_gpt_base_forward.2} parent=43 // loop_body
        %s315 = smul.addr %s310, 4
        %s316 = scalar_lea.vmem [#allocation2], %s315
        %v317 = vld [vmem:[%s316] sm:$0xf]
        %v319 = vunpack.c.l.b16 %v317
        %v320 = vpack.c.b16 %v319, %v319
        %321 = vrot.lane.b32.xlu0 %v320, 96
        %v322 = vpop.permute.xlu0 %321
        %vm323 = vcmask 64512
        %v325 = vsel %vm323, %v317, 0
        %v328 = vsel %vm323, %v322, 0
        %330 = vmatpush.bf16.xpose.msra.mxu0 0
        %331 = vmatpush.bf16.xpose.msra.mxu0 0
        %332 = vmatpush.bf16.xpose.msra.mxu0 0
        %333 = vmatpush.bf16.xpose.msra.mxu0 0
        %334 = vmatpush.bf16.xpose.msra.mxu0 0
        %335 = vmatpush.bf16.xpose.msra.mxu0 0
        %336 = vmatpush.bf16.xpose.msra.mxu0 0
        %337 = vmatpush.bf16.xpose.msra.mxu0 %v328
        %338 = vmatmul.bf16.gmra.mxu0 %v325
        %v339 = vpop.f32.mrf.mxu0
        %v340 = vadd.f32 %v307, %v339
        %v341 = vpop.f32.mrf.mxu0
        %342 = vdwg.mxu0
        %v343 = vsel %vm323, %v340, -inf
        %344 = vmax.xlane.f32.xlu0 %v343
        %v345 = vpop.xlane.xlu0 %344
        %v346 = vsub.f32 %v340, %v345
        %v347 = vmul.f32 %v346, 1.442695
        %v348 = vpow.pop %v347
        %v349 = vsel %vm323, %v348, 0.0
        %350 = vadd.xlane.f32.xlu0 %v349
        %v351 = vpop.xlane.xlu0 %350
        %v352 = vrcp.pop %v351
        %v353 = vmul.f32 %v348, %v352
        %v354 = vpack.c.bf16 %v353, %v353
        %355 = vrot.lane.b32.xlu0 %v320, 64
        %v356 = vpop.permute.xlu0 %355
        %v358 = vsel %vm323, %v354, 0
        %vm360 = vcmask 1043456
        %v362 = vsel %vm360, %v356, 0
        %364 = vmatpush.bf16.msra.mxu0 0
        %365 = vmatpush.bf16.msra.mxu0 0
        %366 = vmatpush.bf16.msra.mxu0 0
        %367 = vmatpush.bf16.msra.mxu0 0
        %368 = vmatpush.bf16.msra.mxu0 0
        %369 = vmatpush.bf16.msra.mxu0 0
        %370 = vmatpush.bf16.msra.mxu0 0
        %371 = vmatpush.bf16.msra.mxu0 %v362
        %372 = vmatmul.bf16.gmra.mxu0 %v358
        %v373 = vpop.f32.mrf.mxu0
        %v374 = vadd.f32 0.0, %v373
        %v375 = vpop.f32.mrf.mxu0
        %376 = vdwg.mxu0
        %377 = vst.msk [vmem:[#allocation3] sm:$0xff] %vm323, %v374
        %378 = vrot.lane.b32.xlu0 %v320, 120
        %v379 = vpop.permute.xlu0 %378
        %380 = vrot.lane.b32.xlu0 %v320, 88
        %v381 = vpop.permute.xlu0 %380
        %v383 = vsel %vm323, %v379, 0
        %v386 = vsel %vm323, %v381, 0
        %388 = vmatpush.bf16.xpose.msra.mxu0 0
        %389 = vmatpush.bf16.xpose.msra.mxu0 0
        %390 = vmatpush.bf16.xpose.msra.mxu0 0
        %391 = vmatpush.bf16.xpose.msra.mxu0 0
        %392 = vmatpush.bf16.xpose.msra.mxu0 0
        %393 = vmatpush.bf16.xpose.msra.mxu0 0
        %394 = vmatpush.bf16.xpose.msra.mxu0 0
        %395 = vmatpush.bf16.xpose.msra.mxu0 %v386
        %396 = vmatmul.bf16.gmra.mxu0 %v383
        %v397 = vpop.f32.mrf.mxu0
        %v398 = vadd.f32 %v307, %v397
        %v399 = vpop.f32.mrf.mxu0
        %400 = vdwg.mxu0
        %v401 = vsel %vm323, %v398, -inf
        %402 = vmax.xlane.f32.xlu0 %v401
        %v403 = vpop.xlane.xlu0 %402
        %v404 = vsub.f32 %v398, %v403
        %v405 = vmul.f32 %v404, 1.442695
        %v406 = vpow.pop %v405
        %v407 = vsel %vm323, %v406, 0.0
        %408 = vadd.xlane.f32.xlu0 %v407
        %v409 = vpop.xlane.xlu0 %408
        %v410 = vrcp.pop %v409
        %v411 = vmul.f32 %v406, %v410
        %v412 = vpack.c.bf16 %v411, %v411
        %413 = vrot.lane.b32.xlu0 %v320, 56
        %v414 = vpop.permute.xlu0 %413
        %v416 = vsel %vm323, %v412, 0
        %v419 = vsel %vm360, %v414, 0
        %421 = vmatpush.bf16.msra.mxu0 0
        %422 = vmatpush.bf16.msra.mxu0 0
        %423 = vmatpush.bf16.msra.mxu0 0
        %424 = vmatpush.bf16.msra.mxu0 0
        %425 = vmatpush.bf16.msra.mxu0 0
        %426 = vmatpush.bf16.msra.mxu0 0
        %427 = vmatpush.bf16.msra.mxu0 0
        %428 = vmatpush.bf16.msra.mxu0 %v419
        %429 = vmatmul.bf16.gmra.mxu0 %v416
        %v430 = vpop.f32.mrf.mxu0
        %v431 = vadd.f32 0.0, %v430
        %v432 = vpop.f32.mrf.mxu0
        %433 = vdwg.mxu0
        %435 = vrot.lane.b32.xlu0 %v431, 8
        %v436 = vpop.permute.xlu0 %435
        %vm438 = vcmask 130112
        %439 = vst.msk [vmem:[#allocation3] sm:$0xff] %vm438, %v436
        %440 = vrot.lane.b32.xlu0 %v320, 112
        %v441 = vpop.permute.xlu0 %440
        %442 = vrot.lane.b32.xlu0 %v320, 80
        %v443 = vpop.permute.xlu0 %442
        %v445 = vsel %vm323, %v441, 0
        %v448 = vsel %vm323, %v443, 0
        %450 = vmatpush.bf16.xpose.msra.mxu0 0
        %451 = vmatpush.bf16.xpose.msra.mxu0 0
        %452 = vmatpush.bf16.xpose.msra.mxu0 0
        %453 = vmatpush.bf16.xpose.msra.mxu0 0
        %454 = vmatpush.bf16.xpose.msra.mxu0 0
        %455 = vmatpush.bf16.xpose.msra.mxu0 0
        %456 = vmatpush.bf16.xpose.msra.mxu0 0
        %457 = vmatpush.bf16.xpose.msra.mxu0 %v448
        %458 = vmatmul.bf16.gmra.mxu0 %v445
        %v459 = vpop.f32.mrf.mxu0
        %v460 = vadd.f32 %v307, %v459
        %v461 = vpop.f32.mrf.mxu0
        %462 = vdwg.mxu0
        %v463 = vsel %vm323, %v460, -inf
        %464 = vmax.xlane.f32.xlu0 %v463
        %v465 = vpop.xlane.xlu0 %464
        %v466 = vsub.f32 %v460, %v465
        %v467 = vmul.f32 %v466, 1.442695
        %v468 = vpow.pop %v467
        %v469 = vsel %vm323, %v468, 0.0
        %470 = vadd.xlane.f32.xlu0 %v469
        %v471 = vpop.xlane.xlu0 %470
        %v472 = vrcp.pop %v471
        %v473 = vmul.f32 %v468, %v472
        %v474 = vpack.c.bf16 %v473, %v473
        %475 = vrot.lane.b32.xlu0 %v320, 48
        %v476 = vpop.permute.xlu0 %475
        %v478 = vsel %vm323, %v474, 0
        %v481 = vsel %vm360, %v476, 0
        %483 = vmatpush.bf16.msra.mxu0 0
        %484 = vmatpush.bf16.msra.mxu0 0
        %485 = vmatpush.bf16.msra.mxu0 0
        %486 = vmatpush.bf16.msra.mxu0 0
        %487 = vmatpush.bf16.msra.mxu0 0
        %488 = vmatpush.bf16.msra.mxu0 0
        %489 = vmatpush.bf16.msra.mxu0 0
        %490 = vmatpush.bf16.msra.mxu0 %v481
        %491 = vmatmul.bf16.gmra.mxu0 %v478
        %v492 = vpop.f32.mrf.mxu0
        %v493 = vadd.f32 0.0, %v492
        %v494 = vpop.f32.mrf.mxu0
        %495 = vdwg.mxu0
        %497 = vrot.lane.b32.xlu0 %v493, 16
        %v498 = vpop.permute.xlu0 %497
        %vm500 = vcmask 195712
        %501 = vst.msk [vmem:[#allocation3] sm:$0xff] %vm500, %v498
        %502 = vrot.lane.b32.xlu0 %v320, 104
        %v503 = vpop.permute.xlu0 %502
        %504 = vrot.lane.b32.xlu0 %v320, 72
        %v505 = vpop.permute.xlu0 %504
        %v507 = vsel %vm323, %v503, 0
        %v510 = vsel %vm323, %v505, 0
        %512 = vmatpush.bf16.xpose.msra.mxu0 0
        %513 = vmatpush.bf16.xpose.msra.mxu0 0
        %514 = vmatpush.bf16.xpose.msra.mxu0 0
        %515 = vmatpush.bf16.xpose.msra.mxu0 0
        %516 = vmatpush.bf16.xpose.msra.mxu0 0
        %517 = vmatpush.bf16.xpose.msra.mxu0 0
        %518 = vmatpush.bf16.xpose.msra.mxu0 0
        %519 = vmatpush.bf16.xpose.msra.mxu0 %v510
        %520 = vmatmul.bf16.gmra.mxu0 %v507
        %v521 = vpop.f32.mrf.mxu0
        %v522 = vadd.f32 %v307, %v521
        %v523 = vpop.f32.mrf.mxu0
        %524 = vdwg.mxu0
        %v525 = vsel %vm323, %v522, -inf
        %526 = vmax.xlane.f32.xlu0 %v525
        %v527 = vpop.xlane.xlu0 %526
        %v528 = vsub.f32 %v522, %v527
        %v529 = vmul.f32 %v528, 1.442695
        %v530 = vpow.pop %v529
        %v531 = vsel %vm323, %v530, 0.0
        %532 = vadd.xlane.f32.xlu0 %v531
        %v533 = vpop.xlane.xlu0 %532
        %v534 = vrcp.pop %v533
        %v535 = vmul.f32 %v530, %v534
        %v536 = vpack.c.bf16 %v535, %v535
        %537 = vrot.lane.b32.xlu0 %v320, 40
        %v538 = vpop.permute.xlu0 %537
        %v540 = vsel %vm323, %v536, 0
        %v543 = vsel %vm360, %v538, 0
        %545 = vmatpush.bf16.msra.mxu0 0
        %546 = vmatpush.bf16.msra.mxu0 0
        %547 = vmatpush.bf16.msra.mxu0 0
        %548 = vmatpush.bf16.msra.mxu0 0
        %549 = vmatpush.bf16.msra.mxu0 0
        %550 = vmatpush.bf16.msra.mxu0 0
        %551 = vmatpush.bf16.msra.mxu0 0
        %552 = vmatpush.bf16.msra.mxu0 %v543
        %553 = vmatmul.bf16.gmra.mxu0 %v540
        %v554 = vpop.f32.mrf.mxu0
        %v555 = vadd.f32 0.0, %v554
        %v556 = vpop.f32.mrf.mxu0
        %557 = vdwg.mxu0
        %559 = vrot.lane.b32.xlu0 %v555, 24
        %v560 = vpop.permute.xlu0 %559
        %vm562 = vcmask 261312
        %563 = vst.msk [vmem:[#allocation3] sm:$0xff] %vm562, %v560
        %v564 = vld [vmem:[#allocation3] sm:$0xff]
        %v565 = vpack.c.bf16 %v564, %v564
        %v566 = vld [vmem:[%s2] sm:$0xf]
        %v567 = vld [vmem:[%s2 + $0x4] sm:$0xf]
        %v568 = vld [vmem:[%s2 + $0x8] sm:$0xf]
        %v569 = vld [vmem:[%s2 + $0xc] sm:$0xf]
        %v571 = vperm.slane %v308, 0
        %v577 = vunpack.c.l.b16 %v566
        %v578 = vunpack.c.l.b16 %v567
        %v579 = vunpack.c.l.b16 %v568
        %v580 = vunpack.c.l.b16 %v569
        %v581 = vpack.c.b16 %v578, %v577
        %v582 = vpack.c.b16 %v580, %v579
        %v586 = vsel %vm283, %v565, 0
        %588 = vmatpush.bf16.msra.mxu0 0
        %589 = vmatpush.bf16.msra.mxu0 0
        %590 = vmatpush.bf16.msra.mxu0 0
        %591 = vmatpush.bf16.msra.mxu0 0
        %592 = vmatpush.bf16.msra.mxu0 0
        %593 = vmatpush.bf16.msra.mxu0 0
        %594 = vmatpush.bf16.msra.mxu0 %v582
        %595 = vmatpush.bf16.msra.mxu0 %v581
        %596 = vmatmul.bf16.gmra.mxu0 %v586
        %v597 = vpop.f32.mrf.mxu0
        %v598 = vadd.f32 %v571, %v597
        %v599 = vpop.f32.mrf.mxu0
        %600 = vdwg.mxu0
        %s601 = smul.u32 %s310, 8
        %s602 = scalar_lea.vmem %s253, %s601
        %603 = vst.msk [vmem:[%s602] sm:$0xff] %vm283, %v598
      $region49: #{cross_cond_gpt_base_forward.2} parent=43 // loop_footer
        %s314 = sadd.s32 1, %s310
      $region50: #{cross_cond_gpt_base_forward.2} parent=43 // loop_footer_branch
        %309 = sbr.rel target = $region46
      $region51: #{cross_cond_gpt_base_forward.2} parent=43 // loop_exit
        _
      %s604 = smul.u32 2, %s17
      %p605 = scmp.lt.s32.totalorder %s604, 3
      %s606 = scalar_select %p605, %s604, 3
      %s607 = smul.addr %s606, 8
      %s608 = scalar_lea.vmem %s6, %s607
      // Predicated region
      $region52: #{cross_cond_gpt_base_forward.2} parent=43 // pred_check
        %p609 = pneg %p166
      $region53: #{cross_cond_gpt_base_forward.2} parent=43 // pred_check_branch
        %611 = sbr.rel (%p609) target = $region55
      $region54: #{cross_cond_gpt_base_forward.2} parent=43 // pred_region
        %s612 = smul.u32 2, %s17
      $region55: #{cross_cond_gpt_base_forward.2} parent=43 // pred_fallthru
        _
    $region44: #{cross_cond_gpt_base_forward.2} parent=5 // pred_fallthru
      _
    %p613 = scmp.le.s32.totalorder 2, %s12
    // Predicated region
    $region56: #{cross_cond_gpt_base_forward.2} parent=5 // pred_check
      %p614 = pneg %p613
    $region57: #{cross_cond_gpt_base_forward.2} parent=5 // pred_check_branch
      %616 = sbr.rel (%p614) target = $region59
    $region58: #{cross_cond_gpt_base_forward.2} parent=5 // pred_region
      %s617 = ssub.s32 %s12, 2
      // Predicated region
      $region60: #{cross_cond_gpt_base_forward.2} parent=58 // pred_check
        %p618 = pneg %p172
      $region61: #{cross_cond_gpt_base_forward.2} parent=58 // pred_check_branch
        %620 = sbr.rel (%p618) target = $region63
      $region62: #{cross_cond_gpt_base_forward.2} parent=58 // pred_region
        %s621 = smul.u32 2, %s18
        %p622 = scmp.lt.s32.totalorder %s621, 3
        %s623 = scalar_select %p622, %s621, 3
        %s624 = smul.addr %s623, 8
        %s625 = scalar_lea.vmem %s6, %s624
      $region63: #{cross_cond_gpt_base_forward.2} parent=58 // pred_fallthru
        _
    $region59: #{cross_cond_gpt_base_forward.2} parent=5 // pred_fallthru
      _
  $region6: #{cross_cond_gpt_base_forward.2} parent=0 // loop_footer
    %s16 = sadd.s32 1, %s12
  $region7: #{cross_cond_gpt_base_forward.2} parent=0 // loop_footer_branch
    %11 = sbr.rel target = $region3
  $region8: #{cross_cond_gpt_base_forward.2} parent=0 // loop_exit
    _

</llo_original>
